<compile_context>
chip_gen: v5e
topology: v5e:2x2
jax: 0.10.0
libtpu: 0.0.40
codegen_flags: <defaults>
</compile_context>

<pallas_src>
import jax
import jax.numpy as jnp
from jax.experimental import pallas as pl
from jax.experimental.pallas import tpu as pltpu


_TARGET_BLOCK_BYTES = 2 * 1024 * 1024   # ~2 MiB per values block
_MIN_PALLAS_BYTES = 1 << 20             # below this, let XLA fuse (1/ls) * x


def _inv_lengthscale_kernel(ls_ref, x_ref, o_ref):
    # ls_ref: (1, D)   lengthscale (positive), resident across the row grid
    # x_ref : (TR, D)  row tile of the flattened input
    # o_ref : (TR, D)  output tile = (1 / lengthscale) * x  (row broadcast)
    # Exact reciprocal keeps bit-parity with the (1/ls)*x reference; the
    # kernel is mem-bound so the divide on a single (1, D) row is fully hidden.
    inv_ls = pl.reciprocal(ls_ref[...], approx=False)
    o_ref[...] = (inv_ls * x_ref[...]).astype(o_ref.dtype)


def _sublane(dtype) -> int:
    # Sublane packing: 8 rows for 4-byte, 16 for 2-byte, 32 for 1-byte dtypes.
    return max(8, 32 // jnp.dtype(dtype).itemsize)


def _pallas_inverse_lengthscale_2d(x2d: jax.Array, ls2d: jax.Array) -> jax.Array:
    """x2d: (R, D) flattened rows, ls2d: (1, D). Returns (R, D)."""
    rows, d = x2d.shape
    dtype = x2d.dtype
    sublane = _sublane(dtype)

    # Row tile: largest multiple of the sublane packing giving ~2 MiB blocks,
    # clamped to the full row extent (block == full array dim is always legal).
    row_bytes = d * jnp.dtype(dtype).itemsize
    tr = (_TARGET_BLOCK_BYTES // max(row_bytes, 1)) // sublane * sublane
    tr = max(tr, sublane)
    if tr >= rows:
        tr = rows
    grid = (pl.cdiv(rows, tr),)   # ragged last block handled by Pallas masking

    return pl.pallas_call(
        _inv_lengthscale_kernel,
        out_shape=jax.ShapeDtypeStruct((rows, d), dtype),
        grid=grid,
        in_specs=[
            pl.BlockSpec((1, d), lambda i: (0, 0)),    # lengthscale: resident
            pl.BlockSpec((tr, d), lambda i: (i, 0)),   # values: row-tiled
        ],
        out_specs=pl.BlockSpec((tr, d), lambda i: (i, 0)),
        compiler_params=pltpu.CompilerParams(
            # Row tiles are independent -> shard the grid across TCs (v7x).
            dimension_semantics=("parallel",),
        ),
    )(ls2d, x2d)


def inverse_lengthscale_transform(
    values: jax.Array,
    lengthscale: jax.Array,
    *,
    min_pallas_bytes: int = _MIN_PALLAS_BYTES,
) -> jax.Array:
    """values: (..., n, d); lengthscale: (1, 1, d) or (1, 1, 1) (non-ARD).

    Returns lengthscale.reciprocal() * values, shaped like values.
    """
    d = values.shape[-1]
    out_dtype = jnp.promote_types(values.dtype, lengthscale.dtype)

    ls_d = lengthscale.shape[-1]
    if lengthscale.size != ls_d or ls_d not in (1, d):
        # TODO(synk): batched lengthscales ((*batch,1,d) with batch>1) fall back
        # to a fused XLA broadcast multiply instead of a per-batch Pallas grid.
        return (jnp.reciprocal(lengthscale) * values).astype(out_dtype)

    values = values.astype(out_dtype)
    # Non-ARD scalar lengthscale -> broadcast to (1, d) once (tiny).
    ls2d = jnp.broadcast_to(lengthscale.reshape(1, ls_d).astype(out_dtype), (1, d))

    # Tiny inputs: kernel dispatch (+ ~0.35 us / grid step) dominates; a fused
    # XLA multiply is strictly faster. Pass min_pallas_bytes=0 to force Pallas.
    if values.size * jnp.dtype(out_dtype).itemsize < min_pallas_bytes:
        return (1.0 / ls2d.reshape(d)) * values

    orig_shape = values.shape
    x2d = values.reshape(-1, d)            # (R, D): rows = flattened leading dims
    rows = x2d.shape[0]

    # Lane-densify: if d underfills the 128-lane vreg and divides 128, fold
    # k consecutive rows into the lane axis so stores are full-width.
    k = 1
    if d < 128 and 128 % d == 0:
        kk = 128 // d
        if rows >= kk and rows % kk == 0:
            k = kk

    if k > 1:
        x_f = x2d.reshape(rows // k, k * d)
        ls_f = jnp.tile(ls2d, (1, k))      # (1, k*d): tiny, computed once
        out2d = _pallas_inverse_lengthscale_2d(x_f, ls_f).reshape(rows, d)
    else:
        out2d = _pallas_inverse_lengthscale_2d(x2d, ls2d)

    return out2d.reshape(orig_shape)


if __name__ == "__main__":
    key = jax.random.PRNGKey(0)
    k_vals, k_ls, k_vals2, k_ls2, k_vals3, k_ls3 = jax.random.split(key, 6)

    # Case 1: small shapes (batch=2, n=8, d=32 ARD features) -> exercises the
    # lane-folding path; force the Pallas kernel with min_pallas_bytes=0.
    batch, n, d = 2, 8, 32
    values = jax.random.normal(k_vals, (batch, n, d), dtype=jnp.float32)
    lengthscale = 0.5 + jax.random.uniform(k_ls, (1, 1, d), dtype=jnp.float32)

    out = inverse_lengthscale_transform(values, lengthscale, min_pallas_bytes=0)
    out = jax.block_until_ready(out)
    ref = (1.0 / lengthscale) * values
    assert out.shape == values.shape
    assert jnp.allclose(out, ref, rtol=1e-6, atol=1e-6), "case 1 mismatch"

    # Case 2: larger input (d=128) -> multi-block row tiling with a resident
    # lengthscale block; goes through the default size-threshold dispatch.
    batch2, n2, d2 = 4, 2048, 128
    values2 = jax.random.normal(k_vals2, (batch2, n2, d2), dtype=jnp.float32)
    lengthscale2 = 0.5 + jax.random.uniform(k_ls2, (1, 1, d2), dtype=jnp.float32)

    out2 = inverse_lengthscale_transform(values2, lengthscale2)
    out2 = jax.block_until_ready(out2)
    ref2 = (1.0 / lengthscale2) * values2
    assert out2.shape == values2.shape
    assert jnp.allclose(out2, ref2, rtol=1e-6, atol=1e-6), "case 2 mismatch"

    # Case 3: non-ARD scalar lengthscale (shape (1, 1, 1)) broadcast over d=16.
    batch3, n3, d3 = 2, 8, 16
    values3 = jax.random.normal(k_vals3, (batch3, n3, d3), dtype=jnp.float32)
    lengthscale3 = 0.5 + jax.random.uniform(k_ls3, (1, 1, 1), dtype=jnp.float32)

    out3 = inverse_lengthscale_transform(values3, lengthscale3, min_pallas_bytes=0)
    out3 = jax.block_until_ready(out3)
    ref3 = (1.0 / lengthscale3) * values3
    assert out3.shape == values3.shape
    assert jnp.allclose(out3, ref3, rtol=1e-6, atol=1e-6), "case 3 mismatch"

    print("KERNEL_OK")
</pallas_src>

<mosaic_0001>
module attributes {stable_mosaic.version = 11 : i64} {
  func.func @_inv_lengthscale_kernel(%arg0: i32, %arg1: memref<1x128xf32, #tpu.memory_space<vmem>>, %arg2: memref<4x128xf32, #tpu.memory_space<vmem>>, %arg3: memref<4x128xf32, #tpu.memory_space<vmem>>) attributes {dimension_semantics = [#tpu.dimension_semantics<parallel>], iteration_bounds = array<i64: 1>, scalar_prefetch = 0 : i64, scratch_operands = 0 : i64, tpu.core_type = #tpu.core_type<tc>, window_params = [{pipeline_mode = #tpu.pipeline_mode<synchronous>, transform_indices = @transform_0, window_bounds = array<i64: 1, 128>}, {transform_indices = @transform_1, window_bounds = array<i64: 4, 128>}, {transform_indices = @transform_2, window_bounds = array<i64: 4, 128>}]} {
    %c0 = arith.constant 0 : index
    %c0_0 = arith.constant 0 : index
    %0 = vector.load %arg1[%c0, %c0_0] : memref<1x128xf32, #tpu.memory_space<vmem>>, vector<1x128xf32>
    %1 = tpu.reciprocal %0 : vector<1x128xf32> -> vector<1x128xf32>
    %c0_1 = arith.constant 0 : index
    %c0_2 = arith.constant 0 : index
    %2 = vector.load %arg2[%c0_1, %c0_2] : memref<4x128xf32, #tpu.memory_space<vmem>>, vector<4x128xf32>
    %3 = vector.broadcast %1 : vector<1x128xf32> to vector<4x128xf32>
    %4 = arith.mulf %3, %2 : vector<4x128xf32>
    %c0_3 = arith.constant 0 : index
    %c0_4 = arith.constant 0 : index
    %5 = vector.load %arg3[%c0_3, %c0_4] : memref<4x128xf32, #tpu.memory_space<vmem>>, vector<4x128xf32>
    tpu.vector_store %arg3[%c0_3, %c0_4], %4 {strides = array<i32>} : memref<4x128xf32, #tpu.memory_space<vmem>>, vector<4x128xf32>,
    return
  }
  func.func @transform_0(%arg0: i32) -> (i32, i32) {
    %c0_i32 = arith.constant 0 : i32
    %c0_i32_0 = arith.constant 0 : i32
    %c0_i32_1 = arith.constant 0 : i32
    return %c0_i32, %c0_i32_0 : i32, i32
  }
  func.func @transform_1(%arg0: i32) -> (i32, i32) {
    %c0_i32 = arith.constant 0 : i32
    %c0_i32_0 = arith.constant 0 : i32
    return %arg0, %c0_i32 : i32, i32
  }
  func.func @transform_2(%arg0: i32) -> (i32, i32) {
    %c0_i32 = arith.constant 0 : i32
    %c0_i32_0 = arith.constant 0 : i32
    return %arg0, %c0_i32 : i32, i32
  }
}

</mosaic_0001>

<llo_original>
// kernel: tpu_custom_call.1
$region0: #{tpu_custom_call.1}
  #allocation0 [shape = 'u32[]', space=smem, size = 0x4, offset = 0x4, fixed_abs, tag = 'smem constant byte address 0x4 - core index']
  #allocation1 [shape = 'u32[72,128]{1,0:T(1,128)}', space=vmem, size = 0x9000, scoped, tag = 'internal scratch']
  %s0 = inlined_call_operand.hbm [shape: f32[1,128], index: 0, kind: input, shape index: {}]
  %s1 = inlined_call_operand.hbm [shape: f32[4,128], index: 1, kind: input, shape index: {}]
  %s2 = inlined_call_operand.hbm [shape: f32[4,128], index: 2, kind: output, shape index: {}]
  %s3 = sld [smem:[#allocation0]]
  $region26: #{tpu_custom_call.1} parent=0
    _
  %s5 = ssub.s32 1, %s3
  %s6 = scalar_select 0, %s5, %s3
  $region1: #{tpu_custom_call.1} parent=0
    #allocation2 [shape = 'u8[512]{0}', space=vmem, size = 0x400, scoped, tag = 'input window, operand 0, single buffered']
    #allocation3 [shape = 's32[1]{0}', space=sflag, size = 0x4, scoped, tag = 'scoped memory for tpu_custom_call.1']
    #allocation4 [shape = 's32[1]{0}', space=sflag, size = 0x4, scoped, tag = 'scoped memory for tpu_custom_call.1']
    #allocation5 [shape = 'u8[2048]{0}', space=vmem, size = 0x800, scoped, tag = 'input window, operand 1, single buffered']
    #allocation6 [shape = 's32[1]{0}', space=sflag, size = 0x4, scoped, tag = 'scoped memory for tpu_custom_call.1']
    #allocation7 [shape = 'u8[2048]{0}', space=vmem, size = 0x800, scoped, tag = 'output window, operand 0, single buffered']
    %7 = vsyncpa [#allocation3], 0
    %8 = vsyncpa [#allocation6], 0
    %9 = vsyncpa [#allocation4], 0
    // Predicated region
    $region2: #{tpu_custom_call.1} parent=1 // pred_check
      _
    $region3: #{tpu_custom_call.1} parent=1 // pred_check_branch
      %11 = sbr.rel (0) target = $region5
    $region4: #{tpu_custom_call.1} parent=1 // pred_region
      %13 = vsyncadd [#allocation3], 0
      %s15 = sshll.u32 %s0, 4
      %s16 = int_to_ptr.hbm [resolvable:$true] %s15
      %s17 = sshll.u32 [#allocation2], 4
      %s18 = int_to_ptr.vmem [resolvable:$true] %s17
      %20 = dma.hbm_to_vmem [thread:$0]  %s16, 16, %s18, [#allocation3]
    $region5: #{tpu_custom_call.1} parent=1 // pred_fallthru
      _
    // Predicated region
    $region6: #{tpu_custom_call.1} parent=1 // pred_check
      _
    $region7: #{tpu_custom_call.1} parent=1 // pred_check_branch
      %22 = sbr.rel (0) target = $region9
    $region8: #{tpu_custom_call.1} parent=1 // pred_region
      %24 = vsyncadd [#allocation6], 0
      %s26 = sshll.u32 %s1, 4
      %s27 = int_to_ptr.hbm [resolvable:$true] %s26
      %s28 = sshll.u32 [#allocation5], 4
      %s29 = int_to_ptr.vmem [resolvable:$true] %s28
      %31 = dma.hbm_to_vmem [thread:$0]  %s27, 64, %s29, [#allocation6]
    $region9: #{tpu_custom_call.1} parent=1 // pred_fallthru
      _
    // Predicated region
    $region10: #{tpu_custom_call.1} parent=1 // pred_check
      _
    $region11: #{tpu_custom_call.1} parent=1 // pred_check_branch
      %33 = sbr.rel (0) target = $region13
    $region12: #{tpu_custom_call.1} parent=1 // pred_region
      %35 = dma.done [#allocation3], 16
    $region13: #{tpu_custom_call.1} parent=1 // pred_fallthru
      _
    // Predicated region
    $region14: #{tpu_custom_call.1} parent=1 // pred_check
      _
    $region15: #{tpu_custom_call.1} parent=1 // pred_check_branch
      %37 = sbr.rel (0) target = $region17
    $region16: #{tpu_custom_call.1} parent=1 // pred_region
      %39 = dma.done [#allocation6], 64
    $region17: #{tpu_custom_call.1} parent=1 // pred_fallthru
      _
    %v40 = vld [vmem:[#allocation2] sm:$0x1]
    %v41 = vrcp.pop %v40
    %v42 = vmul.f32 %v40, %v41
    %v43 = vsub.f32 1.0, %v42
    %v44 = vmul.f32 %v41, %v43
    %v45 = vadd.f32 %v41, %v44
    %vm46 = vweird.f32 %v40
    %vm47 = vweird.f32 %v41
    %vm48 = vmor %vm46, %vm47
    %v49 = vsel %vm48, %v41, %v45
    %v50 = vand.u32 2147483647, %v40
    %vm51 = vcmp.eq.f32.partialorder %v50, 8.507059e+37
    %v52 = vand.u32 %v40, 2147483648
    %v53 = vor.u32 1.1754944e-38, %v52
    %v54 = vsel %vm51, %v53, %v49
    %v55 = vld [vmem:[#allocation5] sm:$0xf]
    %v57 = vperm.slane %v54, 0
    %v59 = vmul.f32 %v57, %v55
    %60 = vst [vmem:[#allocation7] sm:$0xf] %v59
    // Predicated region
    $region18: #{tpu_custom_call.1} parent=1 // pred_check
      _
    $region19: #{tpu_custom_call.1} parent=1 // pred_check_branch
      %62 = sbr.rel (0) target = $region21
    $region20: #{tpu_custom_call.1} parent=1 // pred_region
      %64 = vsyncadd [#allocation4], 0
      %s66 = sshll.u32 [#allocation7], 4
      %s67 = int_to_ptr.vmem [resolvable:$true] %s66
      %s68 = sshll.u32 %s2, 4
      %s69 = int_to_ptr.hbm [resolvable:$true] %s68
      %71 = dma.vmem_to_hbm [thread:$0]  %s67, 64, %s69, [#allocation4]
    $region21: #{tpu_custom_call.1} parent=1 // pred_fallthru
      _
    // Predicated region
    $region22: #{tpu_custom_call.1} parent=1 // pred_check
      _
    $region23: #{tpu_custom_call.1} parent=1 // pred_check_branch
      %73 = sbr.rel (0) target = $region25
    $region24: #{tpu_custom_call.1} parent=1 // pred_region
      %75 = dma.done [#allocation4], 64
    $region25: #{tpu_custom_call.1} parent=1 // pred_fallthru
      _
    %76 = vsyncpa [#allocation3], 1
    %77 = vsyncpa [#allocation6], 1
    %78 = vsyncpa [#allocation4], 1

</llo_original>
